<compile_context>
chip_gen: v7x
topology: tpu7x:2x2x1
jax: 0.10.0
libtpu: 0.0.40
codegen_flags: <defaults>
</compile_context>

<pallas_src>
import numpy as np
import jax
import jax.numpy as jnp
from jax import lax
from jax.experimental import pallas as pl
from jax.experimental.pallas import tpu as pltpu

MIB = 1024 * 1024


# --------------------------------------------------------------------------- #
# Host-side helpers
# --------------------------------------------------------------------------- #
def _adaptive_pool_matrix(in_size: int, out_size: int) -> np.ndarray:
    """Row i averages input indices [floor(i*in/out), ceil((i+1)*in/out))."""
    M = np.zeros((out_size, in_size), dtype=np.float32)
    for i in range(out_size):
        start = (i * in_size) // out_size
        end = -((-(i + 1) * in_size) // out_size)  # ceil division
        M[i, start:end] = 1.0 / (end - start)
    return M


def _round_up(x: int, m: int) -> int:
    return ((x + m - 1) // m) * m


def _vmem_capacity_bytes() -> int:
    """Per-TensorCore VMEM capacity; conservative fallback = v7x (64 MiB)."""
    try:
        cap = int(pltpu.get_tpu_info().vmem_capacity_bytes)
        if cap > 0:
            return cap
    except Exception:
        pass
    return 64 * MIB


def _vmem_limit(needed_bytes: int, cap_bytes: int) -> int:
    limit = max(int(needed_bytes), 24 * MIB)
    return int(min(limit, int(0.9 * cap_bytes)))


def _choose_tile(n_rows: int, row_bytes: int, *, target_tile_bytes: int,
                 min_steps: int, multiple: int, max_rows: int) -> int:
    """Largest T (multiple of `multiple`) with T*row_bytes <= target, while
    keeping >= min_steps grid steps whenever n_rows allows it (pipelining +
    v7x megacore)."""
    t = int(target_tile_bytes // max(row_bytes, 1))
    t = min(t, max_rows)
    t = min(t, max(1, n_rows // min_steps))
    t = max(multiple, (t // multiple) * multiple)
    return int(t)


# --------------------------------------------------------------------------- #
# Kernels
# --------------------------------------------------------------------------- #
def _kron_pool_kernel(x_ref, k_ref, o_ref):
    # x_ref: (T, H*W)   k_ref: (H*W, SSpad)   o_ref: (T, SSpad)   (lane-dense)
    o_ref[...] = jnp.dot(
        x_ref[...], k_ref[...], preferred_element_type=jnp.float32
    ).astype(o_ref.dtype)


def _plane_pool_kernel(x_ref, ph_ref, pwt_ref, o_ref):
    # x_ref: (T, H, W)   ph_ref: (S, H)   pwt_ref: (W, S)   o_ref: (T, S, S)
    t, h, w = x_ref.shape          # static block shape
    s = ph_ref.shape[0]
    x = x_ref[...]
    # W-contraction: one batched matmul, M=H rows per plane (K=W, N=S).
    pwt_b = jnp.broadcast_to(pwt_ref[...][None], (t, w, s))
    tmp = lax.dot_general(
        x, pwt_b,
        dimension_numbers=(((2,), (1,)), ((0,), (0,))),
        preferred_element_type=jnp.float32)                      # (T, H, S)
    # H-contraction on the (much smaller) intermediate.
    ph_b = jnp.broadcast_to(ph_ref[...][None], (t, s, h))
    out = lax.dot_general(
        ph_b, tmp,
        dimension_numbers=(((2,), (1,)), ((0,), (0,))),
        preferred_element_type=jnp.float32)                      # (T, S, S)
    o_ref[...] = out.astype(o_ref.dtype)


# --------------------------------------------------------------------------- #
# Wrapper
# --------------------------------------------------------------------------- #
def my_cutouts(x: jax.Array,
               cut_size: int,
               *,
               kron_bytes_limit: int = 4 * MIB,
               compute_dtype=None) -> jax.Array:
    """Equivalent of MyCutouts(cut_size).forward(x) for x in NCHW layout.

    compute_dtype=jnp.bfloat16 halves the streamed HBM traffic (accumulation
    stays f32); default None keeps full f32 exactness vs. the PyTorch module.
    """
    B, C, H, W = x.shape
    S = int(cut_size)
    N = B * C
    out_dtype = x.dtype
    in_dtype = jnp.dtype(compute_dtype) if compute_dtype is not None else jnp.dtype(x.dtype)
    in_itemsize = in_dtype.itemsize
    out_itemsize = jnp.dtype(out_dtype).itemsize
    cap = _vmem_capacity_bytes()

    ph = _adaptive_pool_matrix(H, S)   # (S, H) f32
    pw = _adaptive_pool_matrix(W, S)   # (S, W) f32

    hw = H * W
    ss = S * S
    ss_pad = _round_up(ss, 128)                        # lane-dense output columns
    k_bytes = hw * ss_pad * in_itemsize                # padded K footprint

    if k_bytes <= kron_bytes_limit:
        # ---------------- lane-dense single-matmul (kron) path ---------------- #
        kmat_np = np.zeros((hw, ss_pad), dtype=np.float32)
        kmat_np[:, :ss] = np.kron(ph.T, pw.T)          # (H*W, S*S) zero-padded cols
        kmat = jnp.asarray(kmat_np).astype(in_dtype)
        x_flat = x.reshape(N, hw).astype(in_dtype)     # lane-dense input slab

        in_row = hw * in_itemsize
        out_row = ss_pad * out_itemsize
        # ~2 MiB per (in+out) tile, >= 8 grid steps when N allows, T % 8 == 0.
        T = _choose_tile(N, in_row + out_row, target_tile_bytes=2 * MIB,
                         min_steps=8, multiple=8, max_rows=8192)
        grid = (pl.cdiv(N, T),)                        # ragged last block, no pad

        vmem_needed = 2 * T * (in_row + out_row) + 2 * k_bytes + 4 * MIB
        flops = int(2 * N * hw * ss_pad)
        bytes_accessed = int(N * (in_row + out_row) + k_bytes)

        out_flat = pl.pallas_call(
            _kron_pool_kernel,
            out_shape=jax.ShapeDtypeStruct((N, ss_pad), out_dtype),
            grid_spec=pltpu.PrefetchScalarGridSpec(
                num_scalar_prefetch=0,
                grid=grid,
                in_specs=[
                    pl.BlockSpec((T, hw), lambda i: (i, 0)),
                    pl.BlockSpec((hw, ss_pad), lambda i: (0, 0)),   # grid-invariant
                ],
                out_specs=pl.BlockSpec((T, ss_pad), lambda i: (i, 0)),
            ),
            compiler_params=pltpu.CompilerParams(
                dimension_semantics=("parallel",),
                vmem_limit_bytes=_vmem_limit(vmem_needed, cap),
            ),
            cost_estimate=pl.CostEstimate(
                flops=flops, transcendentals=0, bytes_accessed=bytes_accessed),
        )(x_flat, kmat)

        if ss_pad != ss:
            out_flat = out_flat[:, :ss]                # drop lane-padding columns
        return out_flat.reshape(B, C, S, S)

    # ---------------------- large-image per-plane path ---------------------- #
    ph_j = jnp.asarray(ph).astype(in_dtype)                        # (S, H)
    pwt_j = jnp.asarray(np.ascontiguousarray(pw.T)).astype(in_dtype)  # (W, S)
    x_planes = x.reshape(N, H, W).astype(in_dtype)

    in_plane = hw * in_itemsize
    out_plane = ss * out_itemsize
    # ~4 MiB of input per grid step, cap at 64 planes, keep >= 4 steps if possible.
    T = _choose_tile(N, in_plane + out_plane, target_tile_bytes=4 * MIB,
                     min_steps=4, multiple=1, max_rows=64)
    grid = (pl.cdiv(N, T),)                            # ragged last block, no pad

    # In-kernel f32 temporaries: broadcast pool mats + (T,H,S) intermediate + out.
    temp_bytes = T * (W * S + 2 * S * H + S * S) * 4
    vmem_needed = (2 * T * (in_plane + out_plane)
                   + 2 * (S * H + W * S) * in_itemsize
                   + temp_bytes + 4 * MIB)
    flops = int(2 * N * (H * W * S + H * S * S))
    bytes_accessed = int(N * (in_plane + out_plane) + (S * H + W * S) * in_itemsize)

    out = pl.pallas_call(
        _plane_pool_kernel,
        out_shape=jax.ShapeDtypeStruct((N, S, S), out_dtype),
        grid_spec=pltpu.PrefetchScalarGridSpec(
            num_scalar_prefetch=0,
            grid=grid,
            in_specs=[
                pl.BlockSpec((T, H, W), lambda i: (i, 0, 0)),
                pl.BlockSpec((S, H), lambda i: (0, 0)),            # grid-invariant
                pl.BlockSpec((W, S), lambda i: (0, 0)),            # grid-invariant
            ],
            out_specs=pl.BlockSpec((T, S, S), lambda i: (i, 0, 0)),
        ),
        compiler_params=pltpu.CompilerParams(
            dimension_semantics=("parallel",),
            vmem_limit_bytes=_vmem_limit(vmem_needed, cap),
        ),
        cost_estimate=pl.CostEstimate(
            flops=flops, transcendentals=0, bytes_accessed=bytes_accessed),
    )(x_planes, ph_j, pwt_j)
    # TODO(synk): planes too large to fit a single (H, W) tile in VMEM (e.g.
    # 4096x4096 f32) would need an inner H-split pipeline; not needed here.
    return out.reshape(B, C, S, S)


# --------------------------------------------------------------------------- #
# Reference + test
# --------------------------------------------------------------------------- #
def _reference(x, cut_size):
    _, _, H, W = x.shape
    ph = jnp.asarray(_adaptive_pool_matrix(H, cut_size))
    pw = jnp.asarray(_adaptive_pool_matrix(W, cut_size))
    return jnp.einsum("sh,bchw,tw->bcst", ph, x, pw)


if __name__ == "__main__":
    key = jax.random.PRNGKey(0)
    k0, k1, k2, k3 = jax.random.split(key, 4)

    # 1) Main small case (lane-dense kron path, single ragged block).
    B, C, H, W = 2, 4, 16, 16
    cut_size = 8
    x = jax.random.normal(k0, (B, C, H, W), dtype=jnp.float32)
    out = jax.block_until_ready(my_cutouts(x, cut_size))
    ref = _reference(x, cut_size)
    assert out.shape == (B, C, cut_size, cut_size)
    assert jnp.allclose(out, ref, atol=1e-5, rtol=1e-5)

    # 2) Same input through the batched plane path (forced).
    out2 = jax.block_until_ready(my_cutouts(x, cut_size, kron_bytes_limit=0))
    assert jnp.allclose(out2, ref, atol=1e-5, rtol=1e-5)

    # 3) Non-uniform adaptive windows + ragged rows (N=6, block rows=8).
    x3 = jax.random.normal(k1, (2, 3, 20, 20), dtype=jnp.float32)
    out3 = jax.block_until_ready(my_cutouts(x3, 7))
    ref3 = _reference(x3, 7)
    assert out3.shape == (2, 3, 7, 7)
    assert jnp.allclose(out3, ref3, atol=1e-5, rtol=1e-5)

    # 4) Kron path with a multi-step grid and a ragged final block (N=52, T=8).
    x4 = jax.random.normal(k2, (4, 13, 16, 16), dtype=jnp.float32)
    out4 = jax.block_until_ready(my_cutouts(x4, 8))
    ref4 = _reference(x4, 8)
    assert jnp.allclose(out4, ref4, atol=1e-5, rtol=1e-5)

    # 5) Plane path with T>1 and a ragged final block (N=14, T=3 -> 5 steps).
    x5 = jax.random.normal(k3, (2, 7, 32, 48), dtype=jnp.float32)
    out5 = jax.block_until_ready(my_cutouts(x5, 8, kron_bytes_limit=0))
    ref5 = _reference(x5, 8)
    assert jnp.allclose(out5, ref5, atol=1e-5, rtol=1e-5)

    # 6) bf16 streaming option (f32 accumulation), relaxed tolerance.
    out6 = jax.block_until_ready(my_cutouts(x, cut_size, compute_dtype=jnp.bfloat16))
    assert jnp.allclose(out6, ref, atol=5e-2, rtol=1e-2)

    print("KERNEL_OK")
</pallas_src>

<mosaic_0001>
module attributes {stable_mosaic.version = 11 : i64} {
  func.func @_kron_pool_kernel(%arg0: i32, %arg1: memref<8x256xf32, #tpu.memory_space<vmem>>, %arg2: memref<256x128xf32, #tpu.memory_space<vmem>>, %arg3: memref<8x128xf32, #tpu.memory_space<vmem>>) attributes {dimension_semantics = [#tpu.dimension_semantics<parallel>], iteration_bounds = array<i64: 1>, scalar_prefetch = 0 : i64, scratch_operands = 0 : i64, tpu.core_type = #tpu.core_type<tc>, window_params = [{transform_indices = @transform_0, window_bounds = array<i64: 8, 256>}, {pipeline_mode = #tpu.pipeline_mode<synchronous>, transform_indices = @transform_1, window_bounds = array<i64: 256, 128>}, {transform_indices = @transform_2, window_bounds = array<i64: 8, 128>}]} {
    %c0 = arith.constant 0 : index
    %c0_0 = arith.constant 0 : index
    %0 = vector.load %arg1[%c0, %c0_0] : memref<8x256xf32, #tpu.memory_space<vmem>>, vector<8x256xf32>
    %c0_1 = arith.constant 0 : index
    %c0_2 = arith.constant 0 : index
    %1 = vector.load %arg2[%c0_1, %c0_2] : memref<256x128xf32, #tpu.memory_space<vmem>>, vector<256x128xf32>
    %cst = arith.constant dense<0.000000e+00> : vector<8x128xf32>
    %2 = tpu.matmul %0, %1, %cst {dimension_numbers = #tpu.dot_dimension_numbers<[1], [0], [0], [1], [0, 0, 1, 1], [], []>} : vector<8x256xf32>, vector<256x128xf32>, vector<8x128xf32> -> vector<8x128xf32>
    %c0_3 = arith.constant 0 : index
    %c0_4 = arith.constant 0 : index
    %3 = vector.load %arg3[%c0_3, %c0_4] : memref<8x128xf32, #tpu.memory_space<vmem>>, vector<8x128xf32>
    tpu.vector_store %arg3[%c0_3, %c0_4], %2 {strides = array<i32>} : memref<8x128xf32, #tpu.memory_space<vmem>>, vector<8x128xf32>,
    return
  }
  func.func @transform_0(%arg0: i32) -> (i32, i32) {
    %c0_i32 = arith.constant 0 : i32
    %c0_i32_0 = arith.constant 0 : i32
    return %arg0, %c0_i32 : i32, i32
  }
  func.func @transform_1(%arg0: i32) -> (i32, i32) {
    %c0_i32 = arith.constant 0 : i32
    %c0_i32_0 = arith.constant 0 : i32
    %c0_i32_1 = arith.constant 0 : i32
    return %c0_i32, %c0_i32_0 : i32, i32
  }
  func.func @transform_2(%arg0: i32) -> (i32, i32) {
    %c0_i32 = arith.constant 0 : i32
    %c0_i32_0 = arith.constant 0 : i32
    return %arg0, %c0_i32 : i32, i32
  }
}

</mosaic_0001>

<llo_original>
// kernel: tpu_custom_call.1
$region0: #{tpu_custom_call.1}
  #allocation0 [shape = 'u32[]', space=smem, size = 0x4, offset = 0x4, fixed_abs, tag = 'smem constant byte address 0x4 - core index']
  #allocation1 [shape = 'u32[144,128]{1,0:T(1,128)}', space=vmem, size = 0x12000, scoped, tag = 'internal scratch']
  %s0 = inlined_call_operand.hbm [shape: f32[8,256], index: 0, kind: input, shape index: {}]
  %s1 = inlined_call_operand.hbm [shape: f32[256,128], index: 1, kind: input, shape index: {}]
  %s2 = inlined_call_operand.hbm [shape: f32[8,128], index: 2, kind: output, shape index: {}]
  %s3 = sld [smem:[#allocation0]]
  $region26: #{tpu_custom_call.1} parent=0
    _
  %s5 = ssub.s32 1, %s3
  %s6 = scalar_select 0, %s5, %s3
  $region1: #{tpu_custom_call.1} parent=0
    #allocation2 [shape = 'u8[8192]{0}', space=vmem, size = 0x2000, scoped, tag = 'input window, operand 0, single buffered']
    #allocation3 [shape = 's32[1]{0}', space=sflag, size = 0x4, scoped, tag = 'scoped memory for tpu_custom_call.1']
    #allocation4 [shape = 's32[1]{0}', space=sflag, size = 0x4, scoped, tag = 'scoped memory for tpu_custom_call.1']
    #allocation5 [shape = 'u8[131072]{0}', space=vmem, size = 0x20000, scoped, tag = 'input window, operand 1, single buffered']
    #allocation6 [shape = 's32[1]{0}', space=sflag, size = 0x4, scoped, tag = 'scoped memory for tpu_custom_call.1']
    #allocation7 [shape = 'u8[4096]{0}', space=vmem, size = 0x1000, scoped, tag = 'output window, operand 0, single buffered']
    %7 = vsyncpa [#allocation3], 0
    %8 = vsyncpa [#allocation6], 0
    %9 = vsyncpa [#allocation4], 0
    // Predicated region
    $region2: #{tpu_custom_call.1} parent=1 // pred_check
      _
    $region3: #{tpu_custom_call.1} parent=1 // pred_check_branch
      %11 = sbr.rel (0) target = $region5
    $region4: #{tpu_custom_call.1} parent=1 // pred_region
      %s13 = ssub.s32 256, 256
      %14 = vsyncadd [#allocation3], %s13
      %s16 = sshll.u32 [#allocation2], 4
      %s17 = int_to_ptr.vmem [resolvable:$true] %s16
      %19 = dma.hbm_to_vmem [thread:$0]  %s0, 256, %s17, [#allocation3]
    $region5: #{tpu_custom_call.1} parent=1 // pred_fallthru
      _
    // Predicated region
    $region6: #{tpu_custom_call.1} parent=1 // pred_check
      _
    $region7: #{tpu_custom_call.1} parent=1 // pred_check_branch
      %21 = sbr.rel (0) target = $region9
    $region8: #{tpu_custom_call.1} parent=1 // pred_region
      %s23 = ssub.s32 4096, 4096
      %24 = vsyncadd [#allocation6], %s23
      %s25 = sshll.u32 [#allocation5], 4
      %s26 = int_to_ptr.vmem [resolvable:$true] %s25
      %31 = dma.hbm_to_vmem [thread:$0]  %s1, 4096, %s26, [#allocation6], 128, 128, 8
    $region9: #{tpu_custom_call.1} parent=1 // pred_fallthru
      _
    // Predicated region
    $region10: #{tpu_custom_call.1} parent=1 // pred_check
      _
    $region11: #{tpu_custom_call.1} parent=1 // pred_check_branch
      %33 = sbr.rel (0) target = $region13
    $region12: #{tpu_custom_call.1} parent=1 // pred_region
      %34 = dma.done [#allocation3], 256
    $region13: #{tpu_custom_call.1} parent=1 // pred_fallthru
      _
    // Predicated region
    $region14: #{tpu_custom_call.1} parent=1 // pred_check
      _
    $region15: #{tpu_custom_call.1} parent=1 // pred_check_branch
      %36 = sbr.rel (0) target = $region17
    $region16: #{tpu_custom_call.1} parent=1 // pred_region
      %37 = dma.done [#allocation6], 4096
    $region17: #{tpu_custom_call.1} parent=1 // pred_fallthru
      _
    %v38 = vld [vmem:[#allocation2] sm:$0xff]
    %v39 = vld [vmem:[#allocation2 + $0x8] sm:$0xff]
    %v40 = vld [vmem:[#allocation5] sm:$0xff]
    %v41 = vld [vmem:[#allocation5 + $0x8] sm:$0xff]
    %v42 = vld [vmem:[#allocation5 + $0x10] sm:$0xff]
    %v43 = vld [vmem:[#allocation5 + $0x18] sm:$0xff]
    %v44 = vld [vmem:[#allocation5 + $0x20] sm:$0xff]
    %v45 = vld [vmem:[#allocation5 + $0x28] sm:$0xff]
    %v46 = vld [vmem:[#allocation5 + $0x30] sm:$0xff]
    %v47 = vld [vmem:[#allocation5 + $0x38] sm:$0xff]
    %v48 = vld [vmem:[#allocation5 + $0x40] sm:$0xff]
    %v49 = vld [vmem:[#allocation5 + $0x48] sm:$0xff]
    %v50 = vld [vmem:[#allocation5 + $0x50] sm:$0xff]
    %v51 = vld [vmem:[#allocation5 + $0x58] sm:$0xff]
    %v52 = vld [vmem:[#allocation5 + $0x60] sm:$0xff]
    %v53 = vld [vmem:[#allocation5 + $0x68] sm:$0xff]
    %v54 = vld [vmem:[#allocation5 + $0x70] sm:$0xff]
    %v55 = vld [vmem:[#allocation5 + $0x78] sm:$0xff]
    %v56 = vld [vmem:[#allocation5 + $0x80] sm:$0xff]
    %v57 = vld [vmem:[#allocation5 + $0x88] sm:$0xff]
    %v58 = vld [vmem:[#allocation5 + $0x90] sm:$0xff]
    %v59 = vld [vmem:[#allocation5 + $0x98] sm:$0xff]
    %v60 = vld [vmem:[#allocation5 + $0xa0] sm:$0xff]
    %v61 = vld [vmem:[#allocation5 + $0xa8] sm:$0xff]
    %v62 = vld [vmem:[#allocation5 + $0xb0] sm:$0xff]
    %v63 = vld [vmem:[#allocation5 + $0xb8] sm:$0xff]
    %v64 = vld [vmem:[#allocation5 + $0xc0] sm:$0xff]
    %v65 = vld [vmem:[#allocation5 + $0xc8] sm:$0xff]
    %v66 = vld [vmem:[#allocation5 + $0xd0] sm:$0xff]
    %v67 = vld [vmem:[#allocation5 + $0xd8] sm:$0xff]
    %v68 = vld [vmem:[#allocation5 + $0xe0] sm:$0xff]
    %v69 = vld [vmem:[#allocation5 + $0xe8] sm:$0xff]
    %v70 = vld [vmem:[#allocation5 + $0xf0] sm:$0xff]
    %v71 = vld [vmem:[#allocation5 + $0xf8] sm:$0xff]
    %72 = vmatprep.subr.mxu0 0.0
    %73 = vmatpush1.msra.mxu0 %v40
    %74 = vmatprep.subr.mxu0 0.0
    %75 = vmatpush1.msra.mxu0 %v41
    %76 = vmatprep.subr.mxu0 0.0
    %77 = vmatpush1.msra.mxu0 %v42
    %78 = vmatprep.subr.mxu0 0.0
    %79 = vmatpush1.msra.mxu0 %v43
    %80 = vmatprep.subr.mxu0 0.0
    %81 = vmatpush1.msra.mxu0 %v44
    %82 = vmatprep.subr.mxu0 0.0
    %83 = vmatpush1.msra.mxu0 %v45
    %84 = vmatprep.subr.mxu0 0.0
    %85 = vmatpush1.msra.mxu0 %v46
    %86 = vmatprep.subr.mxu0 0.0
    %87 = vmatpush1.msra.mxu0 %v47
    %88 = vmatprep.subr.mxu0 0.0
    %89 = vmatpush1.msra.mxu0 %v48
    %90 = vmatprep.subr.mxu0 0.0
    %91 = vmatpush1.msra.mxu0 %v49
    %92 = vmatprep.subr.mxu0 0.0
    %93 = vmatpush1.msra.mxu0 %v50
    %94 = vmatprep.subr.mxu0 0.0
    %95 = vmatpush1.msra.mxu0 %v51
    %96 = vmatprep.subr.mxu0 0.0
    %97 = vmatpush1.msra.mxu0 %v52
    %98 = vmatprep.subr.mxu0 0.0
    %99 = vmatpush1.msra.mxu0 %v53
    %100 = vmatprep.subr.mxu0 0.0
    %101 = vmatpush1.msra.mxu0 %v54
    %102 = vmatprep.subr.mxu0 0.0
    %103 = vmatpush1.msra.mxu0 %v55
    %104 = vmatprep.subr.mxu0 0.0
    %105 = vmatpush1.msra.mxu0 %v56
    %106 = vmatprep.subr.mxu0 0.0
    %107 = vmatpush1.msra.mxu0 %v57
    %108 = vmatprep.subr.mxu0 0.0
    %109 = vmatpush1.msra.mxu0 %v58
    %110 = vmatprep.subr.mxu0 0.0
    %111 = vmatpush1.msra.mxu0 %v59
    %112 = vmatprep.subr.mxu0 0.0
    %113 = vmatpush1.msra.mxu0 %v60
    %114 = vmatprep.subr.mxu0 0.0
    %115 = vmatpush1.msra.mxu0 %v61
    %116 = vmatprep.subr.mxu0 0.0
    %117 = vmatpush1.msra.mxu0 %v62
    %118 = vmatprep.subr.mxu0 0.0
    %119 = vmatpush1.msra.mxu0 %v63
    %120 = vmatprep.subr.mxu0 0.0
    %121 = vmatpush1.msra.mxu0 %v64
    %122 = vmatprep.subr.mxu0 0.0
    %123 = vmatpush1.msra.mxu0 %v65
    %124 = vmatprep.subr.mxu0 0.0
    %125 = vmatpush1.msra.mxu0 %v66
    %126 = vmatprep.subr.mxu0 0.0
    %127 = vmatpush1.msra.mxu0 %v67
    %128 = vmatprep.subr.mxu0 0.0
    %129 = vmatpush1.msra.mxu0 %v68
    %130 = vmatprep.subr.mxu0 0.0
    %131 = vmatpush1.msra.mxu0 %v69
    %132 = vmatprep.subr.mxu0 0.0
    %133 = vmatpush1.msra.mxu0 %v70
    %134 = vmatprep.subr.mxu0 0.0
    %135 = vmatpush1.msra.mxu0 %v71
    %136 = vmatprep.mubr.f32.mxu0 %v39
    %137 = vmatmul.mubr.f32.gmra.mrb[0].mxu0 %v38
    %v138 = vpop.f32.mrb[0].mxu0
    %v139 = vadd.f32 0.0, %v138
    %v140 = vpop.f32.mrb[0].mxu0
    %141 = vdwg.mxu0
    %142 = vst [vmem:[#allocation7] sm:$0xff] %v139
    // Predicated region
    $region18: #{tpu_custom_call.1} parent=1 // pred_check
      _
    $region19: #{tpu_custom_call.1} parent=1 // pred_check_branch
      %144 = sbr.rel (0) target = $region21
    $region20: #{tpu_custom_call.1} parent=1 // pred_region
      %s146 = ssub.s32 128, 128
      %147 = vsyncadd [#allocation4], %s146
      %s149 = sshll.u32 [#allocation7], 4
      %s150 = int_to_ptr.vmem [resolvable:$true] %s149
      %152 = dma.vmem_to_hbm [thread:$0]  %s150, 128, %s2, [#allocation4]
    $region21: #{tpu_custom_call.1} parent=1 // pred_fallthru
      _
    // Predicated region
    $region22: #{tpu_custom_call.1} parent=1 // pred_check
      _
    $region23: #{tpu_custom_call.1} parent=1 // pred_check_branch
      %154 = sbr.rel (0) target = $region25
    $region24: #{tpu_custom_call.1} parent=1 // pred_region
      %155 = dma.done [#allocation4], 128
    $region25: #{tpu_custom_call.1} parent=1 // pred_fallthru
      _
    %156 = vsyncpa [#allocation3], 1
    %157 = vsyncpa [#allocation6], 1
    %158 = vsyncpa [#allocation4], 1

</llo_original>
